<compile_context>
chip_gen: v6e
topology: v6e:2x2x1
jax: 0.10.0
libtpu: 0.0.40
codegen_flags: <defaults>
</compile_context>

<pallas_src>
import functools

import jax
import jax.numpy as jnp
from jax.experimental import pallas as pl
from jax.experimental.pallas import tpu as pltpu


def _focal_loss_kernel(x_ref, t_ref, out_ref, *, alpha, gamma, logits,
                       n_valid, n_blocks, steps_per_split, needs_mask):
    p = pl.program_id(0)          # split (TensorCore) index
    s = pl.program_id(1)          # step within this split
    b = p * steps_per_split + s   # raw global row-block index (may overshoot)

    # Zero this split's resident (8, 128) accumulator on its first step.
    @pl.when(s == 0)
    def _():
        out_ref[...] = jnp.zeros_like(out_ref)

    x = x_ref[...].astype(jnp.float32)
    t = t_ref[...].astype(jnp.float32)

    if logits:
        # binary_cross_entropy_with_logits (numerically stable form)
        bce = jnp.maximum(x, 0.0) - x * t + jnp.log1p(jnp.exp(-jnp.abs(x)))
    else:
        # binary_cross_entropy: PyTorch clamps log() at -100
        log_x = jnp.maximum(jnp.log(x), -100.0)
        log_1mx = jnp.maximum(jnp.log(1.0 - x), -100.0)
        bce = -(t * log_x + (1.0 - t) * log_1mx)

    pt = jnp.exp(-bce)
    omp = 1.0 - pt
    g = float(gamma)
    if g == int(g) and 0.0 <= g <= 8.0:
        # Integer gamma: repeated VPU multiplies, no pow (= log+exp on EUP).
        mod = jnp.ones_like(omp)
        for _ in range(int(g)):
            mod = mod * omp
    else:
        mod = omp ** g
    f_loss = mod * bce
    if float(alpha) != 1.0:
        f_loss = float(alpha) * f_loss

    rows, cols = f_loss.shape

    def accum(fl):
        # (rows, 128) -> (rows//8, 8, 128), sum over the leading axis:
        # sublane-aligned VPU adds into the resident accumulator block.
        out_ref[...] += jnp.sum(fl.reshape(rows // 8, 8, cols), axis=0)

    if needs_mask:
        # Only the very last real block can contain padding / out-of-bounds
        # rows; every other in-range block accumulates unmasked.
        @pl.when(b < n_blocks - 1)
        def _():
            accum(f_loss)

        @pl.when(b == n_blocks - 1)
        def _():
            # Row-based mask avoids 32-bit flat-index overflow (only breaks
            # past ~2^31 rows, i.e. > 1 TiB of f32 input).
            row_ids = b * rows + jax.lax.broadcasted_iota(
                jnp.int32, (rows, cols), 0)
            col_ids = jax.lax.broadcasted_iota(jnp.int32, (rows, cols), 1)
            full_rows = n_valid // cols
            tail = n_valid % cols
            mask = (row_ids < full_rows) | ((row_ids == full_rows) &
                                            (col_ids < tail))
            accum(jnp.where(mask, f_loss, 0.0))
    else:
        # Exact fit: no masking anywhere; just skip overshoot blocks (possible
        # when n_blocks is not a multiple of the split count).
        @pl.when(b < n_blocks)
        def _():
            accum(f_loss)


def focal_loss(inputs, targets, *, alpha=1.0, gamma=2.0, logits=False,
               reduce=True, tile_rows=2048, lane=128, num_splits=2):
    """Scalar focal loss (reduce=True) matching the PyTorch module defaults."""
    assert inputs.shape == targets.shape
    if not reduce:
        # TODO(synk): reduce=False (elementwise output) path not implemented.
        raise NotImplementedError("reduce=False not implemented")

    n_valid = 1
    for d in inputs.shape:
        n_valid *= int(d)

    x_flat = inputs.reshape(-1)
    t_flat = targets.reshape(-1)

    # Pad only the sub-lane tail (< 128 elements). In the common case where the
    # element count is already a multiple of 128 this is a free reshape — no
    # second HBM copy of the inputs.
    rem = n_valid % lane
    if rem:
        pad = lane - rem
        x_flat = jnp.pad(x_flat, (0, pad), constant_values=0.5)
        t_flat = jnp.pad(t_flat, (0, pad), constant_values=0.5)
    n_rows = x_flat.shape[0] // lane
    x2 = x_flat.reshape(n_rows, lane)
    t2 = t_flat.reshape(n_rows, lane)

    # Row tile: multiple of the sublane granularity for the input dtype,
    # clamped so tiny inputs use a single small block.
    itemsize = max(1, jnp.dtype(inputs.dtype).itemsize)
    sub = 8 * max(1, 4 // itemsize)
    tr = min(int(tile_rows), ((n_rows + sub - 1) // sub) * sub)
    tr = max(tr, sub)

    n_blocks = pl.cdiv(n_rows, tr)
    ns = max(1, min(int(num_splits), n_blocks))
    steps = pl.cdiv(n_blocks, ns)
    needs_mask = (n_blocks * tr * lane) != n_valid

    kernel = functools.partial(
        _focal_loss_kernel, alpha=float(alpha), gamma=float(gamma),
        logits=bool(logits), n_valid=n_valid, n_blocks=n_blocks,
        steps_per_split=steps, needs_mask=needs_mask)

    def in_map(p, s):
        # Clamp so overshoot steps (skipped in-kernel) never DMA out of range.
        return (jnp.minimum(p * steps + s, n_blocks - 1), 0)

    partials = pl.pallas_call(
        kernel,
        out_shape=jax.ShapeDtypeStruct((ns * 8, lane), jnp.float32),
        grid_spec=pltpu.PrefetchScalarGridSpec(
            num_scalar_prefetch=0,
            grid=(ns, steps),
            in_specs=[pl.BlockSpec((tr, lane), in_map),
                      pl.BlockSpec((tr, lane), in_map)],
            out_specs=pl.BlockSpec((8, lane), lambda p, s: (p, 0)),
        ),
        compiler_params=pltpu.CompilerParams(
            dimension_semantics=("parallel", "arbitrary")),
    )(x2, t2)

    # Tiny (num_splits*8*128-element) reduce + mean outside the kernel.
    return jnp.sum(partials) / jnp.float32(n_valid)


def focal_loss_ref(inputs, targets, alpha=1.0, gamma=2.0):
    # Pure-JAX reference (logits=False, reduce=True), PyTorch-clamped logs.
    x = inputs.astype(jnp.float32)
    t = targets.astype(jnp.float32)
    bce = -(t * jnp.maximum(jnp.log(x), -100.0)
            + (1.0 - t) * jnp.maximum(jnp.log(1.0 - x), -100.0))
    pt = jnp.exp(-bce)
    return jnp.mean(alpha * (1.0 - pt) ** gamma * bce)


if __name__ == "__main__":
    key = jax.random.PRNGKey(0)
    k1, k2 = jax.random.split(key)
    # NCHW, small shapes: batch=2, channels=4, spatial=16x16.
    shape = (2, 4, 16, 16)
    # logits=False => inputs are probabilities in (0, 1); targets in [0, 1].
    inputs = jax.nn.sigmoid(jax.random.normal(k1, shape, dtype=jnp.float32))
    targets = (jax.random.uniform(k2, shape) > 0.5).astype(jnp.float32)

    loss = focal_loss(inputs, targets, alpha=1.0, gamma=2.0, logits=False)
    loss = jax.block_until_ready(loss)

    ref = focal_loss_ref(inputs, targets)
    assert jnp.allclose(loss, ref, rtol=1e-5, atol=1e-6), (loss, ref)
    print("KERNEL_OK")
</pallas_src>

<mosaic_0001>
module attributes {stable_mosaic.version = 11 : i64} {
  func.func @_focal_loss_kernel(%arg0: i32, %arg1: i32, %arg2: memref<16x128xf32, #tpu.memory_space<vmem>>, %arg3: memref<16x128xf32, #tpu.memory_space<vmem>>, %arg4: memref<8x128xf32, #tpu.memory_space<vmem>>) attributes {dimension_semantics = [#tpu.dimension_semantics<parallel>, #tpu.dimension_semantics<arbitrary>], iteration_bounds = array<i64: 1, 1>, scalar_prefetch = 0 : i64, scratch_operands = 0 : i64, tpu.core_type = #tpu.core_type<tc>, window_params = [{transform_indices = @transform_0, window_bounds = array<i64: 16, 128>}, {transform_indices = @transform_1, window_bounds = array<i64: 16, 128>}, {transform_indices = @transform_2, window_bounds = array<i64: 8, 128>}]} {
    %c1_i32 = arith.constant 1 : i32
    %0 = arith.muli %arg0, %c1_i32 : i32
    %1 = arith.addi %0, %arg1 : i32
    %c0_i32 = arith.constant 0 : i32
    %2 = arith.cmpi eq, %arg1, %c0_i32 : i32
    %3 = arith.extui %2 : i1 to i32
    %c0_i32_0 = arith.constant 0 : i32
    %4 = arith.cmpi ne, %3, %c0_i32_0 : i32
    scf.if %4 {
      %cst_13 = arith.constant 0.000000e+00 : f32
      %34 = vector.broadcast %cst_13 : f32 to vector<8x128xf32>
      %c0_14 = arith.constant 0 : index
      %c0_15 = arith.constant 0 : index
      %35 = vector.load %arg4[%c0_14, %c0_15] : memref<8x128xf32, #tpu.memory_space<vmem>>, vector<8x128xf32>
      tpu.vector_store %arg4[%c0_14, %c0_15], %34 {strides = array<i32>} : memref<8x128xf32, #tpu.memory_space<vmem>>, vector<8x128xf32>,
    } else {
    }
    %c0 = arith.constant 0 : index
    %c0_1 = arith.constant 0 : index
    %5 = vector.load %arg2[%c0, %c0_1] : memref<16x128xf32, #tpu.memory_space<vmem>>, vector<16x128xf32>
    %c0_2 = arith.constant 0 : index
    %c0_3 = arith.constant 0 : index
    %6 = vector.load %arg3[%c0_2, %c0_3] : memref<16x128xf32, #tpu.memory_space<vmem>>, vector<16x128xf32>
    %7 = math.log %5 : vector<16x128xf32>
    %cst = arith.constant -1.000000e+02 : f32
    %8 = vector.broadcast %cst : f32 to vector<16x128xf32>
    %9 = arith.maximumf %7, %8 : vector<16x128xf32>
    %cst_4 = arith.constant 1.000000e+00 : f32
    %10 = vector.broadcast %cst_4 : f32 to vector<16x128xf32>
    %11 = arith.subf %10, %5 : vector<16x128xf32>
    %12 = math.log %11 : vector<16x128xf32>
    %cst_5 = arith.constant -1.000000e+02 : f32
    %13 = vector.broadcast %cst_5 : f32 to vector<16x128xf32>
    %14 = arith.maximumf %12, %13 : vector<16x128xf32>
    %15 = arith.mulf %6, %9 : vector<16x128xf32>
    %cst_6 = arith.constant 1.000000e+00 : f32
    %16 = vector.broadcast %cst_6 : f32 to vector<16x128xf32>
    %17 = arith.subf %16, %6 : vector<16x128xf32>
    %18 = arith.mulf %17, %14 : vector<16x128xf32>
    %19 = arith.addf %15, %18 : vector<16x128xf32>
    %cst_7 = arith.constant 0.000000e+00 : f32
    %20 = vector.broadcast %cst_7 : f32 to vector<16x128xf32>
    %21 = arith.subf %20, %19 : vector<16x128xf32>
    %cst_8 = arith.constant 0.000000e+00 : f32
    %22 = vector.broadcast %cst_8 : f32 to vector<16x128xf32>
    %23 = arith.subf %22, %21 : vector<16x128xf32>
    %24 = math.exp %23 : vector<16x128xf32>
    %cst_9 = arith.constant 1.000000e+00 : f32
    %25 = vector.broadcast %cst_9 : f32 to vector<16x128xf32>
    %26 = arith.subf %25, %24 : vector<16x128xf32>
    %cst_10 = arith.constant 1.000000e+00 : f32
    %27 = vector.broadcast %cst_10 : f32 to vector<16x128xf32>
    %28 = arith.mulf %27, %26 : vector<16x128xf32>
    %29 = arith.mulf %28, %26 : vector<16x128xf32>
    %30 = arith.mulf %29, %21 : vector<16x128xf32>
    %c1_i32_11 = arith.constant 1 : i32
    %31 = arith.cmpi slt, %1, %c1_i32_11 : i32
    %32 = arith.extui %31 : i1 to i32
    %c0_i32_12 = arith.constant 0 : i32
    %33 = arith.cmpi ne, %32, %c0_i32_12 : i32
    scf.if %33 {
      %c0_13 = arith.constant 0 : index
      %c0_14 = arith.constant 0 : index
      %34 = vector.load %arg4[%c0_13, %c0_14] : memref<8x128xf32, #tpu.memory_space<vmem>>, vector<8x128xf32>
      %35 = vector.shape_cast %30 : vector<16x128xf32> to vector<2x8x128xf32>
      %cst_15 = arith.constant dense<0.000000e+00> : vector<8x128xf32>
      %36 = vector.multi_reduction <add>, %35, %cst_15 [0] : vector<2x8x128xf32> to vector<8x128xf32>
      %37 = arith.addf %34, %36 : vector<8x128xf32>
      %c0_16 = arith.constant 0 : index
      %c0_17 = arith.constant 0 : index
      %38 = vector.load %arg4[%c0_16, %c0_17] : memref<8x128xf32, #tpu.memory_space<vmem>>, vector<8x128xf32>
      tpu.vector_store %arg4[%c0_16, %c0_17], %37 {strides = array<i32>} : memref<8x128xf32, #tpu.memory_space<vmem>>, vector<8x128xf32>,
    } else {
    }
    return
  }
  func.func @transform_0(%arg0: i32, %arg1: i32) -> (i32, i32) {
    %c1_i32 = arith.constant 1 : i32
    %0 = arith.muli %arg0, %c1_i32 : i32
    %1 = arith.addi %0, %arg1 : i32
    %c0_i32 = arith.constant 0 : i32
    %2 = arith.minsi %1, %c0_i32 : i32
    %c0_i32_0 = arith.constant 0 : i32
    %c0_i32_1 = arith.constant 0 : i32
    return %2, %c0_i32_0 : i32, i32
  }
  func.func @transform_1(%arg0: i32, %arg1: i32) -> (i32, i32) {
    %c1_i32 = arith.constant 1 : i32
    %0 = arith.muli %arg0, %c1_i32 : i32
    %1 = arith.addi %0, %arg1 : i32
    %c0_i32 = arith.constant 0 : i32
    %2 = arith.minsi %1, %c0_i32 : i32
    %c0_i32_0 = arith.constant 0 : i32
    %c0_i32_1 = arith.constant 0 : i32
    return %2, %c0_i32_0 : i32, i32
  }
  func.func @transform_2(%arg0: i32, %arg1: i32) -> (i32, i32) {
    %c0_i32 = arith.constant 0 : i32
    %c0_i32_0 = arith.constant 0 : i32
    return %arg0, %c0_i32 : i32, i32
  }
}

</mosaic_0001>

<llo_original>
// kernel: tpu_custom_call.1
$region0: #{tpu_custom_call.1}
  #allocation0 [shape = 'u32[]', space=smem, size = 0x4, offset = 0x4, fixed_abs, tag = 'smem constant byte address 0x4 - core index']
  #allocation1 [shape = 'u32[144,128]{1,0:T(1,128)}', space=vmem, size = 0x12000, scoped, tag = 'internal scratch']
  %s0 = inlined_call_operand.hbm [shape: f32[16,128], index: 0, kind: input, shape index: {}]
  %s1 = inlined_call_operand.hbm [shape: f32[16,128], index: 1, kind: input, shape index: {}]
  %s2 = inlined_call_operand.hbm [shape: f32[8,128], index: 2, kind: output, shape index: {}]
  %s3 = sld [smem:[#allocation0]]
  $region34: #{tpu_custom_call.1} parent=0
    _
  %s5 = ssub.s32 1, %s3
  %s6 = scalar_select 0, %s5, %s3
  $region1: #{tpu_custom_call.1} parent=0
    #allocation2 [shape = 'u8[8192]{0}', space=vmem, size = 0x2000, scoped, tag = 'input window, operand 0, single buffered']
    #allocation3 [shape = 's32[1]{0}', space=sflag, size = 0x4, scoped, tag = 'scoped memory for tpu_custom_call.1']
    #allocation4 [shape = 's32[1]{0}', space=sflag, size = 0x4, scoped, tag = 'scoped memory for tpu_custom_call.1']
    #allocation5 [shape = 'u8[8192]{0}', space=vmem, size = 0x2000, scoped, tag = 'input window, operand 1, single buffered']
    #allocation6 [shape = 's32[1]{0}', space=sflag, size = 0x4, scoped, tag = 'scoped memory for tpu_custom_call.1']
    #allocation7 [shape = 'u8[4096]{0}', space=vmem, size = 0x1000, scoped, tag = 'output window, operand 0, single buffered']
    %7 = vsyncpa [#allocation3], 0
    %8 = vsyncpa [#allocation6], 0
    %9 = vsyncpa [#allocation4], 0
    // Predicated region
    $region2: #{tpu_custom_call.1} parent=1 // pred_check
      _
    $region3: #{tpu_custom_call.1} parent=1 // pred_check_branch
      %11 = sbr.rel (0) target = $region5
    $region4: #{tpu_custom_call.1} parent=1 // pred_region
      %s12 = sadd.s32 0, 0
      %p13 = scmp.lt.s32.totalorder %s12, 0
      %s14 = scalar_select %p13, %s12, 0
      %s15 = smul.u32 2, %s14
      %s17 = ssub.s32 256, 256
      %18 = vsyncadd [#allocation3], %s17
      %s19 = smul.addr %s15, 128
      %s20 = scalar_lea.hbm %s0, %s19
      %s21 = sshll.u32 [#allocation2], 4
      %s22 = int_to_ptr.vmem [resolvable:$true] %s21
      %27 = dma.hbm_to_vmem [thread:$0]  %s20, 256, %s22, [#allocation3], 128, 128, 8
    $region5: #{tpu_custom_call.1} parent=1 // pred_fallthru
      _
    // Predicated region
    $region6: #{tpu_custom_call.1} parent=1 // pred_check
      _
    $region7: #{tpu_custom_call.1} parent=1 // pred_check_branch
      %29 = sbr.rel (0) target = $region9
    $region8: #{tpu_custom_call.1} parent=1 // pred_region
      %s30 = sadd.s32 0, 0
      %p31 = scmp.lt.s32.totalorder %s30, 0
      %s32 = scalar_select %p31, %s30, 0
      %s33 = smul.u32 2, %s32
      %s35 = ssub.s32 256, 256
      %36 = vsyncadd [#allocation6], %s35
      %s37 = smul.addr %s33, 128
      %s38 = scalar_lea.hbm %s1, %s37
      %s39 = sshll.u32 [#allocation5], 4
      %s40 = int_to_ptr.vmem [resolvable:$true] %s39
      %45 = dma.hbm_to_vmem [thread:$0]  %s38, 256, %s40, [#allocation6], 128, 128, 8
    $region9: #{tpu_custom_call.1} parent=1 // pred_fallthru
      _
    // Predicated region
    $region10: #{tpu_custom_call.1} parent=1 // pred_check
      _
    $region11: #{tpu_custom_call.1} parent=1 // pred_check_branch
      %47 = sbr.rel (0) target = $region13
    $region12: #{tpu_custom_call.1} parent=1 // pred_region
      %48 = dma.done [#allocation3], 256
    $region13: #{tpu_custom_call.1} parent=1 // pred_fallthru
      _
    // Predicated region
    $region14: #{tpu_custom_call.1} parent=1 // pred_check
      _
    $region15: #{tpu_custom_call.1} parent=1 // pred_check_branch
      %50 = sbr.rel (0) target = $region17
    $region16: #{tpu_custom_call.1} parent=1 // pred_region
      %51 = dma.done [#allocation6], 256
    $region17: #{tpu_custom_call.1} parent=1 // pred_fallthru
      _
    %s52 = sadd.s32 0, 0
    %p53 = scmp.lt.s32.totalorder %s52, 0
    %s54 = scalar_select %p53, %s52, 0
    %s55 = smul.u32 2, %s54
    %s56 = sadd.s32 0, 0
    %p57 = scmp.lt.s32.totalorder %s56, 0
    %s58 = scalar_select %p57, %s56, 0
    %s59 = smul.u32 2, %s58
    %s60 = sadd.s32 0, 0
    %p61 = scmp.eq.s32.totalorder 0, 0
    // Predicated region
    $region18: #{tpu_custom_call.1} parent=1 // pred_check
      %p62 = pneg %p61
    $region19: #{tpu_custom_call.1} parent=1 // pred_check_branch
      %64 = sbr.rel (%p62) target = $region21
    $region20: #{tpu_custom_call.1} parent=1 // pred_region
      %65 = vst [vmem:[#allocation7] sm:$0xff] 0.0
    $region21: #{tpu_custom_call.1} parent=1 // pred_fallthru
      _
    %v66 = vld [vmem:[#allocation2] sm:$0xff]
    %v67 = vld [vmem:[#allocation2 + $0x8] sm:$0xff]
    %v68 = vld [vmem:[#allocation5] sm:$0xff]
    %v69 = vld [vmem:[#allocation5 + $0x8] sm:$0xff]
    %v70 = vlog2.pop %v66
    %v71 = vmul.f32 %v70, 0.6931472
    %v72 = vlog2.pop %v67
    %v73 = vmul.f32 %v72, 0.6931472
    %v74 = vmax.f32 %v71, -100.0
    %v75 = vmax.f32 %v73, -100.0
    %v76 = vsub.f32 1.0, %v66
    %v77 = vsub.f32 1.0, %v67
    %v78 = vlog2.pop %v76
    %v79 = vmul.f32 %v78, 0.6931472
    %v80 = vlog2.pop %v77
    %v81 = vmul.f32 %v80, 0.6931472
    %v82 = vmax.f32 %v79, -100.0
    %v83 = vmax.f32 %v81, -100.0
    %v84 = vmul.f32 %v68, %v74
    %v85 = vmul.f32 %v69, %v75
    %v86 = vsub.f32 1.0, %v68
    %v87 = vsub.f32 1.0, %v69
    %v88 = vmul.f32 %v86, %v82
    %v89 = vmul.f32 %v87, %v83
    %v90 = vadd.f32 %v84, %v88
    %v91 = vadd.f32 %v85, %v89
    %v92 = vsub.f32 0.0, %v90
    %v93 = vsub.f32 0.0, %v91
    %v94 = vsub.f32 0.0, %v92
    %v95 = vsub.f32 0.0, %v93
    %v96 = vmul.f32 %v94, 1.442695
    %v97 = vpow.pop %v96
    %v98 = vmul.f32 %v95, 1.442695
    %v99 = vpow.pop %v98
    %v100 = vsub.f32 1.0, %v97
    %v101 = vsub.f32 1.0, %v99
    %v102 = vmul.f32 %v100, %v100
    %v103 = vmul.f32 %v101, %v101
    %v104 = vmul.f32 %v102, %v92
    %v105 = vmul.f32 %v103, %v93
    %p106 = scmp.lt.s32.totalorder %s60, 1
    // Predicated region
    $region22: #{tpu_custom_call.1} parent=1 // pred_check
      %p107 = pneg %p106
    $region23: #{tpu_custom_call.1} parent=1 // pred_check_branch
      %109 = sbr.rel (%p107) target = $region25
    $region24: #{tpu_custom_call.1} parent=1 // pred_region
      %v110 = vld [vmem:[#allocation7] sm:$0xff]
      %v111 = vadd.f32 %v104, %v105
      %v112 = vadd.f32 %v110, %v111
      %113 = vst [vmem:[#allocation7] sm:$0xff] %v112
    $region25: #{tpu_custom_call.1} parent=1 // pred_fallthru
      _
    // Predicated region
    $region26: #{tpu_custom_call.1} parent=1 // pred_check
      _
    $region27: #{tpu_custom_call.1} parent=1 // pred_check_branch
      %115 = sbr.rel (0) target = $region29
    $region28: #{tpu_custom_call.1} parent=1 // pred_region
      %s117 = ssub.s32 128, 128
      %118 = vsyncadd [#allocation4], %s117
      %s120 = sshll.u32 [#allocation7], 4
      %s121 = int_to_ptr.vmem [resolvable:$true] %s120
      %123 = dma.vmem_to_hbm [thread:$0]  %s121, 128, %s2, [#allocation4]
    $region29: #{tpu_custom_call.1} parent=1 // pred_fallthru
      _
    // Predicated region
    $region30: #{tpu_custom_call.1} parent=1 // pred_check
      _
    $region31: #{tpu_custom_call.1} parent=1 // pred_check_branch
      %125 = sbr.rel (0) target = $region33
    $region32: #{tpu_custom_call.1} parent=1 // pred_region
      %126 = dma.done [#allocation4], 128
    $region33: #{tpu_custom_call.1} parent=1 // pred_fallthru
      _
    %127 = vsyncpa [#allocation3], 1
    %128 = vsyncpa [#allocation6], 1
    %129 = vsyncpa [#allocation4], 1

</llo_original>
